<compile_context>
chip_gen: v5e
topology: v5e:2x2
jax: 0.10.0
libtpu: 0.0.40
codegen_flags: <defaults>
</compile_context>

<pallas_src>
import functools

import jax
import jax.numpy as jnp
from jax.experimental import pallas as pl
from jax.experimental.pallas import tpu as pltpu


def _block_kernel(x_ref, sh_ref, w1_ref, wp_ref, w3_ref, out_ref, *, dw_dtype):
    # x_ref/out_ref: (NB, H, W, C)    sh_ref: (NB, H, W, C//8)
    # w1_ref: (C, Hd) bf16 (BN1 folded)    w3_ref: (Hd, C) bf16 (BN3 folded)
    # wp_ref: (12, Hd) f32 -- rows 0..8 depthwise taps (BN2 folded),
    #                         row 9 = b1, row 10 = b2, row 11 = b3 (lane-padded to Hd).
    NB, H, W, C = x_ref.shape
    cs = sh_ref.shape[3]
    Hd = w1_ref.shape[1]
    M = NB * H * W

    # Whole-block loads; W % 8 == 0 keeps these views layout-preserving (no relayout).
    xf = x_ref[...].reshape(M, C)                        # f32, reused for residual add
    sf = sh_ref[...].reshape(M, cs)

    # ---- 1x1 expand (BN1 folded) + ReLU6: ONE matmul ------------------------------
    # conv1(cat(shift, x2)) == (x with first cs lanes replaced by shift) @ w1
    lane = jax.lax.broadcasted_iota(jnp.int32, (M, C), 1)
    sf_pad = jnp.concatenate([sf, jnp.zeros((M, C - cs), sf.dtype)], axis=1)
    x_cat = jnp.where(lane < cs, sf_pad, xf)             # one vsel against lane iota
    t = jnp.dot(x_cat.astype(jnp.bfloat16), w1_ref[...],
                preferred_element_type=jnp.float32) + wp_ref[9:10, :]
    t = jnp.clip(t, 0.0, 6.0).astype(dw_dtype).reshape(NB, H, W, Hd)

    # ---- depthwise 3x3, stride 1, pad 1 (BN2 folded) + ReLU6 -----------------------
    wdw = wp_ref[0:9, :].astype(dw_dtype)                # (9, Hd), read once
    w_idx = jax.lax.broadcasted_iota(jnp.int32, (1, 1, W, 1), 2)
    # W (sublane) shifts via XLU roll + edge masks -- no padded copies.
    tL = jnp.where(w_idx > 0, pltpu.roll(t, 1, axis=2), 0.0)           # t[.., w-1, :]
    tR = jnp.where(w_idx < W - 1, pltpu.roll(t, W - 1, axis=2), 0.0)   # t[.., w+1, :]
    zrow = jnp.zeros((NB, 1, W, Hd), dw_dtype)
    # Centre row seeds the accumulator; the two H-shifted row groups are added one at
    # a time so only one temp slab is live besides t/tL/tR/acc.
    acc = tL * wdw[3] + t * wdw[4] + tR * wdw[5]
    tmp = tL * wdw[0] + t * wdw[1] + tR * wdw[2]         # row h -> output row h+1
    acc = acc + jnp.concatenate([zrow, tmp[:, :H - 1]], axis=1)
    tmp = tL * wdw[6] + t * wdw[7] + tR * wdw[8]         # row h -> output row h-1
    acc = acc + jnp.concatenate([tmp[:, 1:], zrow], axis=1)
    acc = jnp.clip(acc + wp_ref[10:11, :].astype(dw_dtype), 0.0, 6.0)

    # ---- 1x1 project (BN3 folded) + residual add ------------------------------------
    y = jnp.dot(acc.reshape(M, Hd).astype(jnp.bfloat16), w3_ref[...],
                preferred_element_type=jnp.float32)
    res = xf + y + wp_ref[11:12, :C]
    out_ref[...] = res.reshape(NB, H, W, C).astype(out_ref.dtype)


def fold_params(params):
    """Fold BN scales into conv weights and pack the small per-channel params."""
    C, Hd = params["w1"].shape
    oup = params["w3"].shape[1]
    assert Hd >= oup
    w1 = (params["w1"] * params["s1"]).astype(jnp.bfloat16)             # (C, Hd)
    w3 = (params["w3"] * params["s3"]).astype(jnp.bfloat16)             # (Hd, oup)
    wdw9 = (params["wdw"] * params["s2"].reshape(1, 1, Hd)).reshape(9, Hd)
    b3_pad = jnp.zeros((1, Hd), jnp.float32).at[:, :oup].set(params["b3"])
    wp = jnp.concatenate([wdw9, params["b1"], params["b2"], b3_pad], axis=0)  # (12, Hd)
    return dict(w1=w1, wp=wp, w3=w3)


@functools.partial(jax.jit, static_argnames=("dw_dtype",))
def inverted_residual_with_shift_nhwc(x, shift_buffer, fparams, *,
                                      dw_dtype=jnp.float32):
    """stride=1, inp==oup block (the only config the PyTorch module allows).
    NHWC in / NHWC out, no layout transposes.  Returns (x + conv(cat(shift, x2)), x1)."""
    N, H, W, C = x.shape
    cs = C // 8
    Hd = fparams["w1"].shape[1]
    assert shift_buffer.shape == (N, H, W, cs)
    assert W % 8 == 0, "W must be a multiple of 8 to keep in-kernel views copy-free"

    # Fold enough batch elements into one grid step that the matmul M dim is >= 128.
    rows = H * W
    nb = min(N, max(1, -(-128 // rows)))
    while N % nb:
        nb -= 1
    grid = (N // nb,)
    # TODO(synk): for N == 1 streaming on v7x, add a second "parallel" grid axis over
    # H tiles (with a one-row halo) so both TensorCores stay busy.

    bmap = lambda n: (n, 0, 0, 0)
    wmap = lambda n: (0, 0)

    out = pl.pallas_call(
        functools.partial(_block_kernel, dw_dtype=dw_dtype),
        out_shape=jax.ShapeDtypeStruct((N, H, W, C), x.dtype),
        grid_spec=pltpu.PrefetchScalarGridSpec(
            num_scalar_prefetch=0,
            grid=grid,
            in_specs=[
                pl.BlockSpec((nb, H, W, C), bmap),     # x (expand LHS + residual)
                pl.BlockSpec((nb, H, W, cs), bmap),    # temporal shift buffer
                pl.BlockSpec((C, Hd), wmap),           # w1 * s1   (bf16)
                pl.BlockSpec((12, Hd), wmap),          # taps*s2, b1, b2, b3 (packed)
                pl.BlockSpec((Hd, C), wmap),           # w3 * s3   (bf16)
            ],
            out_specs=pl.BlockSpec((nb, H, W, C), bmap),
        ),
        compiler_params=pltpu.CompilerParams(
            dimension_semantics=("parallel",),
            vmem_limit_bytes=32 * 1024 * 1024),
    )(x, shift_buffer, fparams["w1"], fparams["wp"], fparams["w3"])
    return out, x[..., :cs]


@jax.jit
def inverted_residual_with_shift(x_nchw, shift_buffer_nchw, fparams):
    """PyTorch-layout adapter (NCHW in/out).  A full TSM network would stay NHWC and
    call inverted_residual_with_shift_nhwc directly (no boundary transposes)."""
    cs = x_nchw.shape[1] // 8
    x_nhwc = jnp.transpose(x_nchw, (0, 2, 3, 1))
    sh_nhwc = jnp.transpose(shift_buffer_nchw, (0, 2, 3, 1))
    out_nhwc, _ = inverted_residual_with_shift_nhwc(x_nhwc, sh_nhwc, fparams)
    return jnp.transpose(out_nhwc, (0, 3, 1, 2)), x_nchw[:, :cs]


def _fold_bn(gamma, beta, mean, var, eps=1e-5):
    scale = gamma / jnp.sqrt(var + eps)
    return scale, beta - mean * scale


def make_params(key, inp, oup, expand_ratio):
    hidden = int(inp * expand_ratio)
    ks = jax.random.split(key, 6)
    # PyTorch weight shapes: (hidden, inp, 1, 1), (hidden, 1, 3, 3), (oup, hidden, 1, 1)
    w1_t = 0.1 * jax.random.normal(ks[0], (hidden, inp), jnp.float32)
    wdw_t = 0.1 * jax.random.normal(ks[1], (hidden, 1, 3, 3), jnp.float32)
    w3_t = 0.1 * jax.random.normal(ks[2], (oup, hidden), jnp.float32)

    def bn(k, c):
        k1, k2, k3, k4 = jax.random.split(k, 4)
        gamma = 1.0 + 0.1 * jax.random.normal(k1, (c,), jnp.float32)
        beta = 0.1 * jax.random.normal(k2, (c,), jnp.float32)
        mean = 0.1 * jax.random.normal(k3, (c,), jnp.float32)
        var = 1.0 + 0.1 * jax.random.uniform(k4, (c,), jnp.float32)
        return _fold_bn(gamma, beta, mean, var)

    s1, b1 = bn(ks[3], hidden)
    s2, b2 = bn(ks[4], hidden)
    s3, b3 = bn(ks[5], oup)
    return dict(
        w1=jnp.transpose(w1_t, (1, 0)),                   # (inp, hidden)
        s1=s1.reshape(1, hidden), b1=b1.reshape(1, hidden),
        wdw=jnp.transpose(wdw_t[:, 0], (1, 2, 0)),        # (3, 3, hidden)
        s2=s2.reshape(1, hidden), b2=b2.reshape(1, hidden),
        w3=jnp.transpose(w3_t, (1, 0)),                   # (hidden, oup)
        s3=s3.reshape(1, oup), b3=b3.reshape(1, oup),
    )


def reference(x, shift_buffer, params):
    """Pure-JAX (XLA conv) reference, NCHW in/out, for correctness check."""
    N, C, H, W = x.shape
    cs = C // 8
    x1, x2 = x[:, :cs], x[:, cs:]
    xc = jnp.transpose(jnp.concatenate([shift_buffer, x2], axis=1), (0, 2, 3, 1))
    hd = params["w1"].shape[1]
    hi = jax.lax.Precision.HIGHEST

    def conv(a, w, groups=1, pad="VALID"):
        dn = jax.lax.conv_dimension_numbers(a.shape, w.shape,
                                            ("NHWC", "HWIO", "NHWC"))
        return jax.lax.conv_general_dilated(a, w, (1, 1), pad,
                                            dimension_numbers=dn,
                                            feature_group_count=groups,
                                            precision=hi)

    t = conv(xc, params["w1"].reshape(1, 1, C, hd))
    t = jnp.clip(t * params["s1"][0] + params["b1"][0], 0.0, 6.0)
    t = conv(t, params["wdw"].reshape(3, 3, 1, hd), groups=hd,
             pad=((1, 1), (1, 1)))
    t = jnp.clip(t * params["s2"][0] + params["b2"][0], 0.0, 6.0)
    y = conv(t, params["w3"].reshape(1, 1, hd, C))
    y = y * params["s3"][0] + params["b3"][0]
    return x + jnp.transpose(y, (0, 3, 1, 2)), x1


if __name__ == "__main__":
    inp = oup = 16
    expand_ratio = 6
    N, H, W = 2, 8, 8

    key = jax.random.PRNGKey(0)
    kx, ks, kp = jax.random.split(key, 3)
    x = jax.random.normal(kx, (N, inp, H, W), jnp.float32)
    shift_buffer = jax.random.normal(ks, (N, inp // 8, H, W), jnp.float32)
    params = make_params(kp, inp, oup, expand_ratio)
    fparams = fold_params(params)

    out, x1 = inverted_residual_with_shift(x, shift_buffer, fparams)
    out = jax.block_until_ready(out)

    ref_out, ref_x1 = reference(x, shift_buffer, params)
    assert out.shape == (N, oup, H, W) and x1.shape == (N, inp // 8, H, W)
    max_err = float(jnp.max(jnp.abs(out - ref_out)))
    assert jnp.allclose(out, ref_out, atol=2e-2, rtol=2e-2), max_err
    assert jnp.allclose(x1, ref_x1)
    print("KERNEL_OK")
</pallas_src>

<mosaic_0001>
module attributes {stable_mosaic.version = 11 : i64} {
  func.func @_block_kernel(%arg0: i32, %arg1: memref<2x8x8x16xf32, #tpu.memory_space<vmem>>, %arg2: memref<2x8x8x2xf32, #tpu.memory_space<vmem>>, %arg3: memref<16x96xbf16, #tpu.memory_space<vmem>>, %arg4: memref<12x96xf32, #tpu.memory_space<vmem>>, %arg5: memref<96x16xbf16, #tpu.memory_space<vmem>>, %arg6: memref<2x8x8x16xf32, #tpu.memory_space<vmem>>) attributes {dimension_semantics = [#tpu.dimension_semantics<parallel>], iteration_bounds = array<i64: 1>, scalar_prefetch = 0 : i64, scratch_operands = 0 : i64, tpu.core_type = #tpu.core_type<tc>, window_params = [{transform_indices = @transform_0, window_bounds = array<i64: 2, 8, 8, 16>}, {transform_indices = @transform_1, window_bounds = array<i64: 2, 8, 8, 2>}, {pipeline_mode = #tpu.pipeline_mode<synchronous>, transform_indices = @transform_2, window_bounds = array<i64: 16, 96>}, {pipeline_mode = #tpu.pipeline_mode<synchronous>, transform_indices = @transform_3, window_bounds = array<i64: 12, 96>}, {pipeline_mode = #tpu.pipeline_mode<synchronous>, transform_indices = @transform_4, window_bounds = array<i64: 96, 16>}, {transform_indices = @transform_5, window_bounds = array<i64: 2, 8, 8, 16>}]} {
    %c0 = arith.constant 0 : index
    %c0_0 = arith.constant 0 : index
    %c0_1 = arith.constant 0 : index
    %c0_2 = arith.constant 0 : index
    %0 = vector.load %arg1[%c0, %c0_0, %c0_1, %c0_2] : memref<2x8x8x16xf32, #tpu.memory_space<vmem>>, vector<2x8x8x16xf32>
    %1 = vector.shape_cast %0 : vector<2x8x8x16xf32> to vector<128x16xf32>
    %c0_3 = arith.constant 0 : index
    %c0_4 = arith.constant 0 : index
    %c0_5 = arith.constant 0 : index
    %c0_6 = arith.constant 0 : index
    %2 = vector.load %arg2[%c0_3, %c0_4, %c0_5, %c0_6] : memref<2x8x8x2xf32, #tpu.memory_space<vmem>>, vector<2x8x8x2xf32>
    %3 = vector.shape_cast %2 : vector<2x8x8x2xf32> to vector<128x2xf32>
    %4 = tpu.iota {dimensions = array<i32: 1>} : vector<128x16xi32>
    %cst = arith.constant 0.000000e+00 : f32
    %5 = vector.broadcast %cst : f32 to vector<128x14xf32>
    %6 = tpu.concatenate %3, %5 in 1 : vector<128x2xf32>, vector<128x14xf32> -> vector<128x16xf32>
    %c2_i32 = arith.constant 2 : i32
    %7 = vector.broadcast %c2_i32 : i32 to vector<128x16xi32>
    %8 = arith.cmpi slt, %4, %7 : vector<128x16xi32>
    %9 = arith.select %8, %6, %1 : vector<128x16xi1>, vector<128x16xf32>
    %10 = arith.truncf %9 : vector<128x16xf32> to vector<128x16xbf16>
    %c0_7 = arith.constant 0 : index
    %c0_8 = arith.constant 0 : index
    %11 = vector.load %arg3[%c0_7, %c0_8] : memref<16x96xbf16, #tpu.memory_space<vmem>>, vector<16x96xbf16>
    %cst_9 = arith.constant dense<0.000000e+00> : vector<128x96xf32>
    %12 = tpu.matmul %10, %11, %cst_9 {dimension_numbers = #tpu.dot_dimension_numbers<[1], [0], [0], [1], [0, 0, 1, 1], [], []>} : vector<128x16xbf16>, vector<16x96xbf16>, vector<128x96xf32> -> vector<128x96xf32>
    %c9 = arith.constant 9 : index
    %c0_10 = arith.constant 0 : index
    %13 = vector.load %arg4[%c9, %c0_10] : memref<12x96xf32, #tpu.memory_space<vmem>>, vector<1x96xf32>
    %14 = vector.broadcast %13 : vector<1x96xf32> to vector<128x96xf32>
    %15 = arith.addf %12, %14 : vector<128x96xf32>
    %cst_11 = arith.constant 0.000000e+00 : f32
    %cst_12 = arith.constant 6.000000e+00 : f32
    %16 = vector.broadcast %cst_11 : f32 to vector<128x96xf32>
    %17 = arith.maximumf %16, %15 : vector<128x96xf32>
    %18 = vector.broadcast %cst_12 : f32 to vector<128x96xf32>
    %19 = arith.minimumf %18, %17 : vector<128x96xf32>
    %20 = vector.shape_cast %19 : vector<128x96xf32> to vector<2x8x8x96xf32>
    %c0_13 = arith.constant 0 : index
    %c0_14 = arith.constant 0 : index
    %21 = vector.load %arg4[%c0_13, %c0_14] : memref<12x96xf32, #tpu.memory_space<vmem>>, vector<9x96xf32>
    %22 = tpu.iota {dimensions = array<i32: 2>} : vector<1x1x8x1xi32>
    %c0_i32 = arith.constant 0 : i32
    %23 = vector.broadcast %c0_i32 : i32 to vector<1x1x8x1xi32>
    %24 = arith.cmpi sgt, %22, %23 : vector<1x1x8x1xi32>
    %c1_i32 = arith.constant 1 : i32
    %25 = tpu.dynamic_rotate %20 by %c1_i32 dim 2 : vector<2x8x8x96xf32>, i32 -> vector<2x8x8x96xf32>
    %cst_15 = arith.constant 0.000000e+00 : f32
    %26 = vector.shape_cast %24 : vector<1x1x8x1xi1> to vector<1x1x8x1xi1>
    %27 = vector.broadcast %26 : vector<1x1x8x1xi1> to vector<2x8x8x96xi1>
    %28 = vector.broadcast %cst_15 : f32 to vector<2x8x8x96xf32>
    %29 = arith.select %27, %25, %28 : vector<2x8x8x96xi1>, vector<2x8x8x96xf32>
    %c7_i32 = arith.constant 7 : i32
    %30 = vector.broadcast %c7_i32 : i32 to vector<1x1x8x1xi32>
    %31 = arith.cmpi slt, %22, %30 : vector<1x1x8x1xi32>
    %c7_i32_16 = arith.constant 7 : i32
    %32 = tpu.dynamic_rotate %20 by %c7_i32_16 dim 2 : vector<2x8x8x96xf32>, i32 -> vector<2x8x8x96xf32>
    %cst_17 = arith.constant 0.000000e+00 : f32
    %33 = vector.shape_cast %31 : vector<1x1x8x1xi1> to vector<1x1x8x1xi1>
    %34 = vector.broadcast %33 : vector<1x1x8x1xi1> to vector<2x8x8x96xi1>
    %35 = vector.broadcast %cst_17 : f32 to vector<2x8x8x96xf32>
    %36 = arith.select %34, %32, %35 : vector<2x8x8x96xi1>, vector<2x8x8x96xf32>
    %cst_18 = arith.constant 0.000000e+00 : f32
    %37 = vector.broadcast %cst_18 : f32 to vector<2x1x8x96xf32>
    %38 = vector.extract_strided_slice %21 {offsets = [3, 0], sizes = [1, 96], strides = [1, 1]} : vector<9x96xf32> to vector<1x96xf32>
    %39 = vector.shape_cast %38 : vector<1x96xf32> to vector<96xf32>
    %40 = vector.shape_cast %39 : vector<96xf32> to vector<1x1x1x96xf32>
    %41 = vector.broadcast %40 : vector<1x1x1x96xf32> to vector<2x8x8x96xf32>
    %42 = arith.mulf %29, %41 : vector<2x8x8x96xf32>
    %43 = vector.extract_strided_slice %21 {offsets = [4, 0], sizes = [1, 96], strides = [1, 1]} : vector<9x96xf32> to vector<1x96xf32>
    %44 = vector.shape_cast %43 : vector<1x96xf32> to vector<96xf32>
    %45 = vector.shape_cast %44 : vector<96xf32> to vector<1x1x1x96xf32>
    %46 = vector.broadcast %45 : vector<1x1x1x96xf32> to vector<2x8x8x96xf32>
    %47 = arith.mulf %20, %46 : vector<2x8x8x96xf32>
    %48 = arith.addf %42, %47 : vector<2x8x8x96xf32>
    %49 = vector.extract_strided_slice %21 {offsets = [5, 0], sizes = [1, 96], strides = [1, 1]} : vector<9x96xf32> to vector<1x96xf32>
    %50 = vector.shape_cast %49 : vector<1x96xf32> to vector<96xf32>
    %51 = vector.shape_cast %50 : vector<96xf32> to vector<1x1x1x96xf32>
    %52 = vector.broadcast %51 : vector<1x1x1x96xf32> to vector<2x8x8x96xf32>
    %53 = arith.mulf %36, %52 : vector<2x8x8x96xf32>
    %54 = arith.addf %48, %53 : vector<2x8x8x96xf32>
    %55 = vector.extract_strided_slice %21 {offsets = [0, 0], sizes = [1, 96], strides = [1, 1]} : vector<9x96xf32> to vector<1x96xf32>
    %56 = vector.shape_cast %55 : vector<1x96xf32> to vector<96xf32>
    %57 = vector.shape_cast %56 : vector<96xf32> to vector<1x1x1x96xf32>
    %58 = vector.broadcast %57 : vector<1x1x1x96xf32> to vector<2x8x8x96xf32>
    %59 = arith.mulf %29, %58 : vector<2x8x8x96xf32>
    %60 = vector.extract_strided_slice %21 {offsets = [1, 0], sizes = [1, 96], strides = [1, 1]} : vector<9x96xf32> to vector<1x96xf32>
    %61 = vector.shape_cast %60 : vector<1x96xf32> to vector<96xf32>
    %62 = vector.shape_cast %61 : vector<96xf32> to vector<1x1x1x96xf32>
    %63 = vector.broadcast %62 : vector<1x1x1x96xf32> to vector<2x8x8x96xf32>
    %64 = arith.mulf %20, %63 : vector<2x8x8x96xf32>
    %65 = arith.addf %59, %64 : vector<2x8x8x96xf32>
    %66 = vector.extract_strided_slice %21 {offsets = [2, 0], sizes = [1, 96], strides = [1, 1]} : vector<9x96xf32> to vector<1x96xf32>
    %67 = vector.shape_cast %66 : vector<1x96xf32> to vector<96xf32>
    %68 = vector.shape_cast %67 : vector<96xf32> to vector<1x1x1x96xf32>
    %69 = vector.broadcast %68 : vector<1x1x1x96xf32> to vector<2x8x8x96xf32>
    %70 = arith.mulf %36, %69 : vector<2x8x8x96xf32>
    %71 = arith.addf %65, %70 : vector<2x8x8x96xf32>
    %72 = vector.extract_strided_slice %71 {offsets = [0, 0, 0, 0], sizes = [2, 7, 8, 96], strides = [1, 1, 1, 1]} : vector<2x8x8x96xf32> to vector<2x7x8x96xf32>
    %73 = tpu.concatenate %37, %72 in 1 : vector<2x1x8x96xf32>, vector<2x7x8x96xf32> -> vector<2x8x8x96xf32>
    %74 = arith.addf %54, %73 : vector<2x8x8x96xf32>
    %75 = vector.extract_strided_slice %21 {offsets = [6, 0], sizes = [1, 96], strides = [1, 1]} : vector<9x96xf32> to vector<1x96xf32>
    %76 = vector.shape_cast %75 : vector<1x96xf32> to vector<96xf32>
    %77 = vector.shape_cast %76 : vector<96xf32> to vector<1x1x1x96xf32>
    %78 = vector.broadcast %77 : vector<1x1x1x96xf32> to vector<2x8x8x96xf32>
    %79 = arith.mulf %29, %78 : vector<2x8x8x96xf32>
    %80 = vector.extract_strided_slice %21 {offsets = [7, 0], sizes = [1, 96], strides = [1, 1]} : vector<9x96xf32> to vector<1x96xf32>
    %81 = vector.shape_cast %80 : vector<1x96xf32> to vector<96xf32>
    %82 = vector.shape_cast %81 : vector<96xf32> to vector<1x1x1x96xf32>
    %83 = vector.broadcast %82 : vector<1x1x1x96xf32> to vector<2x8x8x96xf32>
    %84 = arith.mulf %20, %83 : vector<2x8x8x96xf32>
    %85 = arith.addf %79, %84 : vector<2x8x8x96xf32>
    %86 = vector.extract_strided_slice %21 {offsets = [8, 0], sizes = [1, 96], strides = [1, 1]} : vector<9x96xf32> to vector<1x96xf32>
    %87 = vector.shape_cast %86 : vector<1x96xf32> to vector<96xf32>
    %88 = vector.shape_cast %87 : vector<96xf32> to vector<1x1x1x96xf32>
    %89 = vector.broadcast %88 : vector<1x1x1x96xf32> to vector<2x8x8x96xf32>
    %90 = arith.mulf %36, %89 : vector<2x8x8x96xf32>
    %91 = arith.addf %85, %90 : vector<2x8x8x96xf32>
    %92 = vector.extract_strided_slice %91 {offsets = [0, 1, 0, 0], sizes = [2, 7, 8, 96], strides = [1, 1, 1, 1]} : vector<2x8x8x96xf32> to vector<2x7x8x96xf32>
    %93 = tpu.concatenate %92, %37 in 1 : vector<2x7x8x96xf32>, vector<2x1x8x96xf32> -> vector<2x8x8x96xf32>
    %94 = arith.addf %74, %93 : vector<2x8x8x96xf32>
    %c10 = arith.constant 10 : index
    %c0_19 = arith.constant 0 : index
    %95 = vector.load %arg4[%c10, %c0_19] : memref<12x96xf32, #tpu.memory_space<vmem>>, vector<1x96xf32>
    %96 = vector.shape_cast %95 : vector<1x96xf32> to vector<1x1x1x96xf32>
    %97 = vector.broadcast %96 : vector<1x1x1x96xf32> to vector<2x8x8x96xf32>
    %98 = arith.addf %94, %97 : vector<2x8x8x96xf32>
    %cst_20 = arith.constant 0.000000e+00 : f32
    %cst_21 = arith.constant 6.000000e+00 : f32
    %99 = vector.broadcast %cst_20 : f32 to vector<2x8x8x96xf32>
    %100 = arith.maximumf %99, %98 : vector<2x8x8x96xf32>
    %101 = vector.broadcast %cst_21 : f32 to vector<2x8x8x96xf32>
    %102 = arith.minimumf %101, %100 : vector<2x8x8x96xf32>
    %103 = vector.shape_cast %102 : vector<2x8x8x96xf32> to vector<128x96xf32>
    %104 = arith.truncf %103 : vector<128x96xf32> to vector<128x96xbf16>
    %c0_22 = arith.constant 0 : index
    %c0_23 = arith.constant 0 : index
    %105 = vector.load %arg5[%c0_22, %c0_23] : memref<96x16xbf16, #tpu.memory_space<vmem>>, vector<96x16xbf16>
    %cst_24 = arith.constant dense<0.000000e+00> : vector<128x16xf32>
    %106 = tpu.matmul %104, %105, %cst_24 {dimension_numbers = #tpu.dot_dimension_numbers<[1], [0], [0], [1], [0, 0, 1, 1], [], []>} : vector<128x96xbf16>, vector<96x16xbf16>, vector<128x16xf32> -> vector<128x16xf32>
    %107 = arith.addf %1, %106 : vector<128x16xf32>
    %c11 = arith.constant 11 : index
    %c0_25 = arith.constant 0 : index
    %108 = vector.load %arg4[%c11, %c0_25] : memref<12x96xf32, #tpu.memory_space<vmem>>, vector<1x16xf32>
    %109 = vector.broadcast %108 : vector<1x16xf32> to vector<128x16xf32>
    %110 = arith.addf %107, %109 : vector<128x16xf32>
    %111 = vector.shape_cast %110 : vector<128x16xf32> to vector<2x8x8x16xf32>
    %c0_26 = arith.constant 0 : index
    %c0_27 = arith.constant 0 : index
    %c0_28 = arith.constant 0 : index
    %c0_29 = arith.constant 0 : index
    %112 = vector.load %arg6[%c0_26, %c0_27, %c0_28, %c0_29] : memref<2x8x8x16xf32, #tpu.memory_space<vmem>>, vector<2x8x8x16xf32>
    tpu.vector_store %arg6[%c0_26, %c0_27, %c0_28, %c0_29], %111 {strides = array<i32>} : memref<2x8x8x16xf32, #tpu.memory_space<vmem>>, vector<2x8x8x16xf32>,
    return
  }
  func.func @transform_0(%arg0: i32) -> (i32, i32, i32, i32) {
    %c0_i32 = arith.constant 0 : i32
    %c0_i32_0 = arith.constant 0 : i32
    %c0_i32_1 = arith.constant 0 : i32
    %c0_i32_2 = arith.constant 0 : i32
    return %arg0, %c0_i32, %c0_i32_0, %c0_i32_1 : i32, i32, i32, i32
  }
  func.func @transform_1(%arg0: i32) -> (i32, i32, i32, i32) {
    %c0_i32 = arith.constant 0 : i32
    %c0_i32_0 = arith.constant 0 : i32
    %c0_i32_1 = arith.constant 0 : i32
    %c0_i32_2 = arith.constant 0 : i32
    return %arg0, %c0_i32, %c0_i32_0, %c0_i32_1 : i32, i32, i32, i32
  }
  func.func @transform_2(%arg0: i32) -> (i32, i32) {
    %c0_i32 = arith.constant 0 : i32
    %c0_i32_0 = arith.constant 0 : i32
    %c0_i32_1 = arith.constant 0 : i32
    return %c0_i32, %c0_i32_0 : i32, i32
  }
  func.func @transform_3(%arg0: i32) -> (i32, i32) {
    %c0_i32 = arith.constant 0 : i32
    %c0_i32_0 = arith.constant 0 : i32
    %c0_i32_1 = arith.constant 0 : i32
    return %c0_i32, %c0_i32_0 : i32, i32
  }
  func.func @transform_4(%arg0: i32) -> (i32, i32) {
    %c0_i32 = arith.constant 0 : i32
    %c0_i32_0 = arith.constant 0 : i32
    %c0_i32_1 = arith.constant 0 : i32
    return %c0_i32, %c0_i32_0 : i32, i32
  }
  func.func @transform_5(%arg0: i32) -> (i32, i32, i32, i32) {
    %c0_i32 = arith.constant 0 : i32
    %c0_i32_0 = arith.constant 0 : i32
    %c0_i32_1 = arith.constant 0 : i32
    %c0_i32_2 = arith.constant 0 : i32
    return %arg0, %c0_i32, %c0_i32_0, %c0_i32_1 : i32, i32, i32, i32
  }
}

</mosaic_0001>

<llo_original>
// kernel: inverted_residual_with_shift_nhwc.1
$region0: #{inverted_residual_with_shift_nhwc.1}
  #allocation0 [shape = 'u32[]', space=smem, size = 0x4, offset = 0x4, fixed_abs, tag = 'smem constant byte address 0x4 - core index']
  #allocation1 [shape = 'u32[72,128]{1,0:T(1,128)}', space=vmem, size = 0x9000, scoped, tag = 'internal scratch']
  %s0 = inlined_call_operand.vmem [shape: f32[2,8,8,16], index: 0, kind: input, shape index: {}]
  %s1 = inlined_call_operand.vmem [shape: f32[2,8,8,2], index: 1, kind: input, shape index: {}]
  %s2 = inlined_call_operand.vmem [shape: bf16[16,96], index: 2, kind: input, shape index: {}]
  %s3 = inlined_call_operand.vmem [shape: f32[12,96], index: 3, kind: input, shape index: {}]
  %s4 = inlined_call_operand.vmem [shape: bf16[96,16], index: 4, kind: input, shape index: {}]
  %s5 = inlined_call_operand.hbm [shape: f32[2,8,8,16], index: 5, kind: output, shape index: {}]
  %s6 = sld [smem:[#allocation0]]
  $region30: #{inverted_residual_with_shift_nhwc.1} parent=0
    _
  %s8 = ssub.s32 1, %s6
  %s9 = scalar_select 0, %s8, %s6
  $region1: #{inverted_residual_with_shift_nhwc.1} parent=0
    #allocation2 [shape = 'u8[65536]{0}', space=vmem, size = 0x10000, scoped, tag = 'output window, operand 0, single buffered']
    #allocation3 [shape = 's32[1]{0}', space=sflag, size = 0x4, scoped, tag = 'scoped memory for inverted_residual_with_shift_nhwc.1']
    %10 = vsyncpa [#allocation3], 0
    // Predicated region
    $region2: #{inverted_residual_with_shift_nhwc.1} parent=1 // pred_check
      _
    $region3: #{inverted_residual_with_shift_nhwc.1} parent=1 // pred_check_branch
      %12 = sbr.rel (0) target = $region5
    $region4: #{inverted_residual_with_shift_nhwc.1} parent=1 // pred_region
      _
    $region5: #{inverted_residual_with_shift_nhwc.1} parent=1 // pred_fallthru
      _
    // Predicated region
    $region6: #{inverted_residual_with_shift_nhwc.1} parent=1 // pred_check
      _
    $region7: #{inverted_residual_with_shift_nhwc.1} parent=1 // pred_check_branch
      %14 = sbr.rel (0) target = $region9
    $region8: #{inverted_residual_with_shift_nhwc.1} parent=1 // pred_region
      _
    $region9: #{inverted_residual_with_shift_nhwc.1} parent=1 // pred_fallthru
      _
    // Predicated region
    $region10: #{inverted_residual_with_shift_nhwc.1} parent=1 // pred_check
      _
    $region11: #{inverted_residual_with_shift_nhwc.1} parent=1 // pred_check_branch
      %16 = sbr.rel (0) target = $region13
    $region12: #{inverted_residual_with_shift_nhwc.1} parent=1 // pred_region
      _
    $region13: #{inverted_residual_with_shift_nhwc.1} parent=1 // pred_fallthru
      _
    // Predicated region
    $region14: #{inverted_residual_with_shift_nhwc.1} parent=1 // pred_check
      _
    $region15: #{inverted_residual_with_shift_nhwc.1} parent=1 // pred_check_branch
      %18 = sbr.rel (0) target = $region17
    $region16: #{inverted_residual_with_shift_nhwc.1} parent=1 // pred_region
      _
    $region17: #{inverted_residual_with_shift_nhwc.1} parent=1 // pred_fallthru
      _
    // Predicated region
    $region18: #{inverted_residual_with_shift_nhwc.1} parent=1 // pred_check
      _
    $region19: #{inverted_residual_with_shift_nhwc.1} parent=1 // pred_check_branch
      %20 = sbr.rel (0) target = $region21
    $region20: #{inverted_residual_with_shift_nhwc.1} parent=1 // pred_region
      _
    $region21: #{inverted_residual_with_shift_nhwc.1} parent=1 // pred_fallthru
      _
    %v22 = vld [vmem:[%s0] sm:$0xff]
    %v23 = vld [vmem:[%s0 + $0x8] sm:$0xff]
    %v24 = vld [vmem:[%s0 + $0x10] sm:$0xff]
    %v25 = vld [vmem:[%s0 + $0x18] sm:$0xff]
    %v26 = vld [vmem:[%s0 + $0x20] sm:$0xff]
    %v27 = vld [vmem:[%s0 + $0x28] sm:$0xff]
    %v28 = vld [vmem:[%s0 + $0x30] sm:$0xff]
    %v29 = vld [vmem:[%s0 + $0x38] sm:$0xff]
    %v30 = vld [vmem:[%s0 + $0x40] sm:$0xff]
    %v31 = vld [vmem:[%s0 + $0x48] sm:$0xff]
    %v32 = vld [vmem:[%s0 + $0x50] sm:$0xff]
    %v33 = vld [vmem:[%s0 + $0x58] sm:$0xff]
    %v34 = vld [vmem:[%s0 + $0x60] sm:$0xff]
    %v35 = vld [vmem:[%s0 + $0x68] sm:$0xff]
    %v36 = vld [vmem:[%s0 + $0x70] sm:$0xff]
    %v37 = vld [vmem:[%s0 + $0x78] sm:$0xff]
    %v38 = vld [vmem:[%s1] sm:$0xff]
    %v39 = vld [vmem:[%s1 + $0x8] sm:$0xff]
    %v40 = vld [vmem:[%s1 + $0x10] sm:$0xff]
    %v41 = vld [vmem:[%s1 + $0x18] sm:$0xff]
    %v42 = vld [vmem:[%s1 + $0x20] sm:$0xff]
    %v43 = vld [vmem:[%s1 + $0x28] sm:$0xff]
    %v44 = vld [vmem:[%s1 + $0x30] sm:$0xff]
    %v45 = vld [vmem:[%s1 + $0x38] sm:$0xff]
    %v46 = vld [vmem:[%s1 + $0x40] sm:$0xff]
    %v47 = vld [vmem:[%s1 + $0x48] sm:$0xff]
    %v48 = vld [vmem:[%s1 + $0x50] sm:$0xff]
    %v49 = vld [vmem:[%s1 + $0x58] sm:$0xff]
    %v50 = vld [vmem:[%s1 + $0x60] sm:$0xff]
    %v51 = vld [vmem:[%s1 + $0x68] sm:$0xff]
    %v52 = vld [vmem:[%s1 + $0x70] sm:$0xff]
    %v53 = vld [vmem:[%s1 + $0x78] sm:$0xff]
    %v54 = vlaneseq
    %v55 = vand.u32 %v54, 127
    %vm56 = vcmask 15360
    %v57 = vsel %vm56, %v38, 0.0
    %v58 = vsel %vm56, %v39, 0.0
    %v59 = vsel %vm56, %v40, 0.0
    %v60 = vsel %vm56, %v41, 0.0
    %v61 = vsel %vm56, %v42, 0.0
    %v62 = vsel %vm56, %v43, 0.0
    %v63 = vsel %vm56, %v44, 0.0
    %v64 = vsel %vm56, %v45, 0.0
    %v65 = vsel %vm56, %v46, 0.0
    %v66 = vsel %vm56, %v47, 0.0
    %v67 = vsel %vm56, %v48, 0.0
    %v68 = vsel %vm56, %v49, 0.0
    %v69 = vsel %vm56, %v50, 0.0
    %v70 = vsel %vm56, %v51, 0.0
    %v71 = vsel %vm56, %v52, 0.0
    %v72 = vsel %vm56, %v53, 0.0
    %vm73 = vcmp.lt.s32.totalorder %v55, 2
    %v74 = vsel %vm73, %v57, %v22
    %v75 = vsel %vm73, %v58, %v23
    %v76 = vsel %vm73, %v59, %v24
    %v77 = vsel %vm73, %v60, %v25
    %v78 = vsel %vm73, %v61, %v26
    %v79 = vsel %vm73, %v62, %v27
    %v80 = vsel %vm73, %v63, %v28
    %v81 = vsel %vm73, %v64, %v29
    %v82 = vsel %vm73, %v65, %v30
    %v83 = vsel %vm73, %v66, %v31
    %v84 = vsel %vm73, %v67, %v32
    %v85 = vsel %vm73, %v68, %v33
    %v86 = vsel %vm73, %v69, %v34
    %v87 = vsel %vm73, %v70, %v35
    %v88 = vsel %vm73, %v71, %v36
    %v89 = vsel %vm73, %v72, %v37
    %v90 = vpack.c.bf16 %v75, %v74
    %v91 = vpack.c.bf16 %v77, %v76
    %v92 = vpack.c.bf16 %v79, %v78
    %v93 = vpack.c.bf16 %v81, %v80
    %v94 = vpack.c.bf16 %v83, %v82
    %v95 = vpack.c.bf16 %v85, %v84
    %v96 = vpack.c.bf16 %v87, %v86
    %v97 = vpack.c.bf16 %v89, %v88
    %v98 = vld [vmem:[%s2] sm:$0xf]
    %v99 = vld [vmem:[%s2 + $0x4] sm:$0xf]
    %v100 = vld [vmem:[%s3 + $0x9] sm:$0x1]
    %v101 = vperm.slane %v100, 0
    %v104 = vunpack.c.l.b16 %v98
    %v105 = vunpack.c.l.b16 %v99
    %v106 = vpack.c.b16 %v105, %v104
    %vm108 = vcmask 130048
    %v110 = vsel %vm108, %v90, 0
    %v113 = vsel %vm108, %v91, 0
    %v116 = vsel %vm108, %v92, 0
    %v119 = vsel %vm108, %v93, 0
    %v122 = vsel %vm108, %v94, 0
    %v125 = vsel %vm108, %v95, 0
    %v128 = vsel %vm108, %v96, 0
    %v131 = vsel %vm108, %v97, 0
    %133 = vmatpush.bf16.msra.mxu0 0
    %134 = vmatpush.bf16.msra.mxu0 0
    %135 = vmatpush.bf16.msra.mxu0 0
    %136 = vmatpush.bf16.msra.mxu0 0
    %137 = vmatpush.bf16.msra.mxu0 0
    %138 = vmatpush.bf16.msra.mxu0 0
    %139 = vmatpush.bf16.msra.mxu0 0
    %140 = vmatpush.bf16.msra.mxu0 %v106
    %141 = vmatmul.bf16.gmra.mxu0 %v110
    %v142 = vpop.f32.mrf.mxu0
    %v143 = vadd.f32 %v101, %v142
    %v144 = vpop.f32.mrf.mxu0
    %v145 = vadd.f32 %v101, %v144
    %146 = vmatmul.bf16.gmra.mxu0 %v113
    %v147 = vpop.f32.mrf.mxu0
    %v148 = vadd.f32 %v101, %v147
    %v149 = vpop.f32.mrf.mxu0
    %v150 = vadd.f32 %v101, %v149
    %151 = vmatmul.bf16.gmra.mxu0 %v116
    %v152 = vpop.f32.mrf.mxu0
    %v153 = vadd.f32 %v101, %v152
    %v154 = vpop.f32.mrf.mxu0
    %v155 = vadd.f32 %v101, %v154
    %156 = vmatmul.bf16.gmra.mxu0 %v119
    %v157 = vpop.f32.mrf.mxu0
    %v158 = vadd.f32 %v101, %v157
    %v159 = vpop.f32.mrf.mxu0
    %v160 = vadd.f32 %v101, %v159
    %161 = vmatmul.bf16.gmra.mxu0 %v122
    %v162 = vpop.f32.mrf.mxu0
    %v163 = vadd.f32 %v101, %v162
    %v164 = vpop.f32.mrf.mxu0
    %v165 = vadd.f32 %v101, %v164
    %166 = vmatmul.bf16.gmra.mxu0 %v125
    %v167 = vpop.f32.mrf.mxu0
    %v168 = vadd.f32 %v101, %v167
    %v169 = vpop.f32.mrf.mxu0
    %v170 = vadd.f32 %v101, %v169
    %171 = vmatmul.bf16.gmra.mxu0 %v128
    %v172 = vpop.f32.mrf.mxu0
    %v173 = vadd.f32 %v101, %v172
    %v174 = vpop.f32.mrf.mxu0
    %v175 = vadd.f32 %v101, %v174
    %176 = vmatmul.bf16.gmra.mxu0 %v131
    %v177 = vpop.f32.mrf.mxu0
    %v178 = vadd.f32 %v101, %v177
    %v179 = vpop.f32.mrf.mxu0
    %v180 = vadd.f32 %v101, %v179
    %181 = vdwg.mxu0
    %v182 = vmax.f32 %v143, 0.0
    %v183 = vmax.f32 %v145, 0.0
    %v184 = vmax.f32 %v148, 0.0
    %v185 = vmax.f32 %v150, 0.0
    %v186 = vmax.f32 %v153, 0.0
    %v187 = vmax.f32 %v155, 0.0
    %v188 = vmax.f32 %v158, 0.0
    %v189 = vmax.f32 %v160, 0.0
    %v190 = vmax.f32 %v163, 0.0
    %v191 = vmax.f32 %v165, 0.0
    %v192 = vmax.f32 %v168, 0.0
    %v193 = vmax.f32 %v170, 0.0
    %v194 = vmax.f32 %v173, 0.0
    %v195 = vmax.f32 %v175, 0.0
    %v196 = vmax.f32 %v178, 0.0
    %v197 = vmax.f32 %v180, 0.0
    %v198 = vmin.f32 %v182, 6.0
    %v199 = vmin.f32 %v183, 6.0
    %v200 = vmin.f32 %v184, 6.0
    %v201 = vmin.f32 %v185, 6.0
    %v202 = vmin.f32 %v186, 6.0
    %v203 = vmin.f32 %v187, 6.0
    %v204 = vmin.f32 %v188, 6.0
    %v205 = vmin.f32 %v189, 6.0
    %v206 = vmin.f32 %v190, 6.0
    %v207 = vmin.f32 %v191, 6.0
    %v208 = vmin.f32 %v192, 6.0
    %v209 = vmin.f32 %v193, 6.0
    %v210 = vmin.f32 %v194, 6.0
    %v211 = vmin.f32 %v195, 6.0
    %v212 = vmin.f32 %v196, 6.0
    %v213 = vmin.f32 %v197, 6.0
    %v214 = vld [vmem:[%s3] sm:$0xff]
    %v215 = vld [vmem:[%s3 + $0x8] sm:$0x1]
    %v216 = vlaneseq
    %v217 = vshrl.u32 %v216, 7
    %vm218 = vcmp.gt.s32.totalorder %v217, 0
    %v219 = vrot.slane %v198, 7
    %v220 = vrot.slane %v199, 7
    %v221 = vrot.slane %v200, 7
    %v222 = vrot.slane %v201, 7
    %v223 = vrot.slane %v202, 7
    %v224 = vrot.slane %v203, 7
    %v225 = vrot.slane %v204, 7
    %v226 = vrot.slane %v205, 7
    %v227 = vrot.slane %v206, 7
    %v228 = vrot.slane %v207, 7
    %v229 = vrot.slane %v208, 7
    %v230 = vrot.slane %v209, 7
    %v231 = vrot.slane %v210, 7
    %v232 = vrot.slane %v211, 7
    %v233 = vrot.slane %v212, 7
    %v234 = vrot.slane %v213, 7
    %v235 = vsel %vm218, 1, 0
    %vm236 = vcmp.eq.s32.totalorder %v235, 1
    %v237 = vsel %vm236, %v219, 0.0
    %v238 = vsel %vm236, %v220, 0.0
    %v239 = vsel %vm236, %v221, 0.0
    %v240 = vsel %vm236, %v222, 0.0
    %v241 = vsel %vm236, %v223, 0.0
    %v242 = vsel %vm236, %v224, 0.0
    %v243 = vsel %vm236, %v225, 0.0
    %v244 = vsel %vm236, %v226, 0.0
    %v245 = vsel %vm236, %v227, 0.0
    %v246 = vsel %vm236, %v228, 0.0
    %v247 = vsel %vm236, %v229, 0.0
    %v248 = vsel %vm236, %v230, 0.0
    %v249 = vsel %vm236, %v231, 0.0
    %v250 = vsel %vm236, %v232, 0.0
    %v251 = vsel %vm236, %v233, 0.0
    %v252 = vsel %vm236, %v234, 0.0
    %vm253 = vcmp.lt.s32.totalorder %v217, 7
    %v254 = vrot.slane %v198, 1
    %v255 = vrot.slane %v199, 1
    %v256 = vrot.slane %v200, 1
    %v257 = vrot.slane %v201, 1
    %v258 = vrot.slane %v202, 1
    %v259 = vrot.slane %v203, 1
    %v260 = vrot.slane %v204, 1
    %v261 = vrot.slane %v205, 1
    %v262 = vrot.slane %v206, 1
    %v263 = vrot.slane %v207, 1
    %v264 = vrot.slane %v208, 1
    %v265 = vrot.slane %v209, 1
    %v266 = vrot.slane %v210, 1
    %v267 = vrot.slane %v211, 1
    %v268 = vrot.slane %v212, 1
    %v269 = vrot.slane %v213, 1
    %v270 = vsel %vm253, 1, 0
    %vm271 = vcmp.eq.s32.totalorder %v270, 1
    %v272 = vsel %vm271, %v254, 0.0
    %v273 = vsel %vm271, %v255, 0.0
    %v274 = vsel %vm271, %v256, 0.0
    %v275 = vsel %vm271, %v257, 0.0
    %v276 = vsel %vm271, %v258, 0.0
    %v277 = vsel %vm271, %v259, 0.0
    %v278 = vsel %vm271, %v260, 0.0
    %v279 = vsel %vm271, %v261, 0.0
    %v280 = vsel %vm271, %v262, 0.0
    %v281 = vsel %vm271, %v263, 0.0
    %v282 = vsel %vm271, %v264, 0.0
    %v283 = vsel %vm271, %v265, 0.0
    %v284 = vsel %vm271, %v266, 0.0
    %v285 = vsel %vm271, %v267, 0.0
    %v286 = vsel %vm271, %v268, 0.0
    %v287 = vsel %vm271, %v269, 0.0
    %v288 = vperm.slane %v214, 3
    %v289 = vmul.f32 %v237, %v288
    %v290 = vmul.f32 %v238, %v288
    %v291 = vmul.f32 %v239, %v288
    %v292 = vmul.f32 %v240, %v288
    %v293 = vmul.f32 %v241, %v288
    %v294 = vmul.f32 %v242, %v288
    %v295 = vmul.f32 %v243, %v288
    %v296 = vmul.f32 %v244, %v288
    %v297 = vmul.f32 %v245, %v288
    %v298 = vmul.f32 %v246, %v288
    %v299 = vmul.f32 %v247, %v288
    %v300 = vmul.f32 %v248, %v288
    %v301 = vmul.f32 %v249, %v288
    %v302 = vmul.f32 %v250, %v288
    %v303 = vmul.f32 %v251, %v288
    %v304 = vmul.f32 %v252, %v288
    %v305 = vperm.slane %v214, 4
    %v306 = vmul.f32 %v198, %v305
    %v307 = vmul.f32 %v199, %v305
    %v308 = vmul.f32 %v200, %v305
    %v309 = vmul.f32 %v201, %v305
    %v310 = vmul.f32 %v202, %v305
    %v311 = vmul.f32 %v203, %v305
    %v312 = vmul.f32 %v204, %v305
    %v313 = vmul.f32 %v205, %v305
    %v314 = vmul.f32 %v206, %v305
    %v315 = vmul.f32 %v207, %v305
    %v316 = vmul.f32 %v208, %v305
    %v317 = vmul.f32 %v209, %v305
    %v318 = vmul.f32 %v210, %v305
    %v319 = vmul.f32 %v211, %v305
    %v320 = vmul.f32 %v212, %v305
    %v321 = vmul.f32 %v213, %v305
    %v322 = vadd.f32 %v289, %v306
    %v323 = vadd.f32 %v290, %v307
    %v324 = vadd.f32 %v291, %v308
    %v325 = vadd.f32 %v292, %v309
    %v326 = vadd.f32 %v293, %v310
    %v327 = vadd.f32 %v294, %v311
    %v328 = vadd.f32 %v295, %v312
    %v329 = vadd.f32 %v296, %v313
    %v330 = vadd.f32 %v297, %v314
    %v331 = vadd.f32 %v298, %v315
    %v332 = vadd.f32 %v299, %v316
    %v333 = vadd.f32 %v300, %v317
    %v334 = vadd.f32 %v301, %v318
    %v335 = vadd.f32 %v302, %v319
    %v336 = vadd.f32 %v303, %v320
    %v337 = vadd.f32 %v304, %v321
    %v338 = vperm.slane %v214, 5
    %v339 = vmul.f32 %v272, %v338
    %v340 = vmul.f32 %v273, %v338
    %v341 = vmul.f32 %v274, %v338
    %v342 = vmul.f32 %v275, %v338
    %v343 = vmul.f32 %v276, %v338
    %v344 = vmul.f32 %v277, %v338
    %v345 = vmul.f32 %v278, %v338
    %v346 = vmul.f32 %v279, %v338
    %v347 = vmul.f32 %v280, %v338
    %v348 = vmul.f32 %v281, %v338
    %v349 = vmul.f32 %v282, %v338
    %v350 = vmul.f32 %v283, %v338
    %v351 = vmul.f32 %v284, %v338
    %v352 = vmul.f32 %v285, %v338
    %v353 = vmul.f32 %v286, %v338
    %v354 = vmul.f32 %v287, %v338
    %v355 = vadd.f32 %v322, %v339
    %v356 = vadd.f32 %v323, %v340
    %v357 = vadd.f32 %v324, %v341
    %v358 = vadd.f32 %v325, %v342
    %v359 = vadd.f32 %v326, %v343
    %v360 = vadd.f32 %v327, %v344
    %v361 = vadd.f32 %v328, %v345
    %v362 = vadd.f32 %v329, %v346
    %v363 = vadd.f32 %v330, %v347
    %v364 = vadd.f32 %v331, %v348
    %v365 = vadd.f32 %v332, %v349
    %v366 = vadd.f32 %v333, %v350
    %v367 = vadd.f32 %v334, %v351
    %v368 = vadd.f32 %v335, %v352
    %v369 = vadd.f32 %v336, %v353
    %v370 = vadd.f32 %v337, %v354
    %v371 = vperm.slane %v214, 0
    %v372 = vmul.f32 %v237, %v371
    %v373 = vmul.f32 %v238, %v371
    %v374 = vmul.f32 %v239, %v371
    %v375 = vmul.f32 %v240, %v371
    %v376 = vmul.f32 %v241, %v371
    %v377 = vmul.f32 %v242, %v371
    %v378 = vmul.f32 %v243, %v371
    %v379 = vmul.f32 %v245, %v371
    %v380 = vmul.f32 %v246, %v371
    %v381 = vmul.f32 %v247, %v371
    %v382 = vmul.f32 %v248, %v371
    %v383 = vmul.f32 %v249, %v371
    %v384 = vmul.f32 %v250, %v371
    %v385 = vmul.f32 %v251, %v371
    %v386 = vperm.slane %v214, 1
    %v387 = vmul.f32 %v198, %v386
    %v388 = vmul.f32 %v199, %v386
    %v389 = vmul.f32 %v200, %v386
    %v390 = vmul.f32 %v201, %v386
    %v391 = vmul.f32 %v202, %v386
    %v392 = vmul.f32 %v203, %v386
    %v393 = vmul.f32 %v204, %v386
    %v394 = vmul.f32 %v206, %v386
    %v395 = vmul.f32 %v207, %v386
    %v396 = vmul.f32 %v208, %v386
    %v397 = vmul.f32 %v209, %v386
    %v398 = vmul.f32 %v210, %v386
    %v399 = vmul.f32 %v211, %v386
    %v400 = vmul.f32 %v212, %v386
    %v401 = vadd.f32 %v372, %v387
    %v402 = vadd.f32 %v373, %v388
    %v403 = vadd.f32 %v374, %v389
    %v404 = vadd.f32 %v375, %v390
    %v405 = vadd.f32 %v376, %v391
    %v406 = vadd.f32 %v377, %v392
    %v407 = vadd.f32 %v378, %v393
    %v408 = vadd.f32 %v379, %v394
    %v409 = vadd.f32 %v380, %v395
    %v410 = vadd.f32 %v381, %v396
    %v411 = vadd.f32 %v382, %v397
    %v412 = vadd.f32 %v383, %v398
    %v413 = vadd.f32 %v384, %v399
    %v414 = vadd.f32 %v385, %v400
    %v415 = vperm.slane %v214, 2
    %v416 = vmul.f32 %v272, %v415
    %v417 = vmul.f32 %v273, %v415
    %v418 = vmul.f32 %v274, %v415
    %v419 = vmul.f32 %v275, %v415
    %v420 = vmul.f32 %v276, %v415
    %v421 = vmul.f32 %v277, %v415
    %v422 = vmul.f32 %v278, %v415
    %v423 = vmul.f32 %v280, %v415
    %v424 = vmul.f32 %v281, %v415
    %v425 = vmul.f32 %v282, %v415
    %v426 = vmul.f32 %v283, %v415
    %v427 = vmul.f32 %v284, %v415
    %v428 = vmul.f32 %v285, %v415
    %v429 = vmul.f32 %v286, %v415
    %v430 = vadd.f32 %v401, %v416
    %v431 = vadd.f32 %v402, %v417
    %v432 = vadd.f32 %v403, %v418
    %v433 = vadd.f32 %v404, %v419
    %v434 = vadd.f32 %v405, %v420
    %v435 = vadd.f32 %v406, %v421
    %v436 = vadd.f32 %v407, %v422
    %v437 = vadd.f32 %v408, %v423
    %v438 = vadd.f32 %v409, %v424
    %v439 = vadd.f32 %v410, %v425
    %v440 = vadd.f32 %v411, %v426
    %v441 = vadd.f32 %v412, %v427
    %v442 = vadd.f32 %v413, %v428
    %v443 = vadd.f32 %v414, %v429
    %v444 = vadd.f32 %v355, 0.0
    %v445 = vadd.f32 %v356, %v430
    %v446 = vadd.f32 %v357, %v431
    %v447 = vadd.f32 %v358, %v432
    %v448 = vadd.f32 %v359, %v433
    %v449 = vadd.f32 %v360, %v434
    %v450 = vadd.f32 %v361, %v435
    %v451 = vadd.f32 %v362, %v436
    %v452 = vadd.f32 %v363, 0.0
    %v453 = vadd.f32 %v364, %v437
    %v454 = vadd.f32 %v365, %v438
    %v455 = vadd.f32 %v366, %v439
    %v456 = vadd.f32 %v367, %v440
    %v457 = vadd.f32 %v368, %v441
    %v458 = vadd.f32 %v369, %v442
    %v459 = vadd.f32 %v370, %v443
    %v460 = vperm.slane %v214, 6
    %v461 = vmul.f32 %v238, %v460
    %v462 = vmul.f32 %v239, %v460
    %v463 = vmul.f32 %v240, %v460
    %v464 = vmul.f32 %v241, %v460
    %v465 = vmul.f32 %v242, %v460
    %v466 = vmul.f32 %v243, %v460
    %v467 = vmul.f32 %v244, %v460
    %v468 = vmul.f32 %v246, %v460
    %v469 = vmul.f32 %v247, %v460
    %v470 = vmul.f32 %v248, %v460
    %v471 = vmul.f32 %v249, %v460
    %v472 = vmul.f32 %v250, %v460
    %v473 = vmul.f32 %v251, %v460
    %v474 = vmul.f32 %v252, %v460
    %v475 = vperm.slane %v214, 7
    %v476 = vmul.f32 %v199, %v475
    %v477 = vmul.f32 %v200, %v475
    %v478 = vmul.f32 %v201, %v475
    %v479 = vmul.f32 %v202, %v475
    %v480 = vmul.f32 %v203, %v475
    %v481 = vmul.f32 %v204, %v475
    %v482 = vmul.f32 %v205, %v475
    %v483 = vmul.f32 %v207, %v475
    %v484 = vmul.f32 %v208, %v475
    %v485 = vmul.f32 %v209, %v475
    %v486 = vmul.f32 %v210, %v475
    %v487 = vmul.f32 %v211, %v475
    %v488 = vmul.f32 %v212, %v475
    %v489 = vmul.f32 %v213, %v475
    %v490 = vadd.f32 %v461, %v476
    %v491 = vadd.f32 %v462, %v477
    %v492 = vadd.f32 %v463, %v478
    %v493 = vadd.f32 %v464, %v479
    %v494 = vadd.f32 %v465, %v480
    %v495 = vadd.f32 %v466, %v481
    %v496 = vadd.f32 %v467, %v482
    %v497 = vadd.f32 %v468, %v483
    %v498 = vadd.f32 %v469, %v484
    %v499 = vadd.f32 %v470, %v485
    %v500 = vadd.f32 %v471, %v486
    %v501 = vadd.f32 %v472, %v487
    %v502 = vadd.f32 %v473, %v488
    %v503 = vadd.f32 %v474, %v489
    %v504 = vperm.slane %v215, 0
    %v505 = vmul.f32 %v273, %v504
    %v506 = vmul.f32 %v274, %v504
    %v507 = vmul.f32 %v275, %v504
    %v508 = vmul.f32 %v276, %v504
    %v509 = vmul.f32 %v277, %v504
    %v510 = vmul.f32 %v278, %v504
    %v511 = vmul.f32 %v279, %v504
    %v512 = vmul.f32 %v281, %v504
    %v513 = vmul.f32 %v282, %v504
    %v514 = vmul.f32 %v283, %v504
    %v515 = vmul.f32 %v284, %v504
    %v516 = vmul.f32 %v285, %v504
    %v517 = vmul.f32 %v286, %v504
    %v518 = vmul.f32 %v287, %v504
    %v519 = vadd.f32 %v490, %v505
    %v520 = vadd.f32 %v491, %v506
    %v521 = vadd.f32 %v492, %v507
    %v522 = vadd.f32 %v493, %v508
    %v523 = vadd.f32 %v494, %v509
    %v524 = vadd.f32 %v495, %v510
    %v525 = vadd.f32 %v496, %v511
    %v526 = vadd.f32 %v497, %v512
    %v527 = vadd.f32 %v498, %v513
    %v528 = vadd.f32 %v499, %v514
    %v529 = vadd.f32 %v500, %v515
    %v530 = vadd.f32 %v501, %v516
    %v531 = vadd.f32 %v502, %v517
    %v532 = vadd.f32 %v503, %v518
    %v533 = vadd.f32 %v444, %v519
    %v534 = vadd.f32 %v445, %v520
    %v535 = vadd.f32 %v446, %v521
    %v536 = vadd.f32 %v447, %v522
    %v537 = vadd.f32 %v448, %v523
    %v538 = vadd.f32 %v449, %v524
    %v539 = vadd.f32 %v450, %v525
    %v540 = vadd.f32 %v451, 0.0
    %v541 = vadd.f32 %v452, %v526
    %v542 = vadd.f32 %v453, %v527
    %v543 = vadd.f32 %v454, %v528
    %v544 = vadd.f32 %v455, %v529
    %v545 = vadd.f32 %v456, %v530
    %v546 = vadd.f32 %v457, %v531
    %v547 = vadd.f32 %v458, %v532
    %v548 = vadd.f32 %v459, 0.0
    %v549 = vld [vmem:[%s3 + $0xa] sm:$0x1]
    %v550 = vperm.slane %v549, 0
    %v551 = vadd.f32 %v533, %v550
    %v552 = vadd.f32 %v534, %v550
    %v553 = vadd.f32 %v535, %v550
    %v554 = vadd.f32 %v536, %v550
    %v555 = vadd.f32 %v537, %v550
    %v556 = vadd.f32 %v538, %v550
    %v557 = vadd.f32 %v539, %v550
    %v558 = vadd.f32 %v540, %v550
    %v559 = vadd.f32 %v541, %v550
    %v560 = vadd.f32 %v542, %v550
    %v561 = vadd.f32 %v543, %v550
    %v562 = vadd.f32 %v544, %v550
    %v563 = vadd.f32 %v545, %v550
    %v564 = vadd.f32 %v546, %v550
    %v565 = vadd.f32 %v547, %v550
    %v566 = vadd.f32 %v548, %v550
    %v567 = vmax.f32 %v551, 0.0
    %v568 = vmax.f32 %v552, 0.0
    %v569 = vmax.f32 %v553, 0.0
    %v570 = vmax.f32 %v554, 0.0
    %v571 = vmax.f32 %v555, 0.0
    %v572 = vmax.f32 %v556, 0.0
    %v573 = vmax.f32 %v557, 0.0
    %v574 = vmax.f32 %v558, 0.0
    %v575 = vmax.f32 %v559, 0.0
    %v576 = vmax.f32 %v560, 0.0
    %v577 = vmax.f32 %v561, 0.0
    %v578 = vmax.f32 %v562, 0.0
    %v579 = vmax.f32 %v563, 0.0
    %v580 = vmax.f32 %v564, 0.0
    %v581 = vmax.f32 %v565, 0.0
    %v582 = vmax.f32 %v566, 0.0
    %v583 = vmin.f32 %v567, 6.0
    %v584 = vmin.f32 %v568, 6.0
    %v585 = vmin.f32 %v569, 6.0
    %v586 = vmin.f32 %v570, 6.0
    %v587 = vmin.f32 %v571, 6.0
    %v588 = vmin.f32 %v572, 6.0
    %v589 = vmin.f32 %v573, 6.0
    %v590 = vmin.f32 %v574, 6.0
    %v591 = vmin.f32 %v575, 6.0
    %v592 = vmin.f32 %v576, 6.0
    %v593 = vmin.f32 %v577, 6.0
    %v594 = vmin.f32 %v578, 6.0
    %v595 = vmin.f32 %v579, 6.0
    %v596 = vmin.f32 %v580, 6.0
    %v597 = vmin.f32 %v581, 6.0
    %v598 = vmin.f32 %v582, 6.0
    %v599 = vpack.c.bf16 %v584, %v583
    %v600 = vpack.c.bf16 %v586, %v585
    %v601 = vpack.c.bf16 %v588, %v587
    %v602 = vpack.c.bf16 %v590, %v589
    %v603 = vpack.c.bf16 %v592, %v591
    %v604 = vpack.c.bf16 %v594, %v593
    %v605 = vpack.c.bf16 %v596, %v595
    %v606 = vpack.c.bf16 %v598, %v597
    %v607 = vld [vmem:[%s4] sm:$0xf]
    %v608 = vld [vmem:[%s4 + $0x4] sm:$0xf]
    %v609 = vld [vmem:[%s4 + $0x8] sm:$0xf]
    %v610 = vld [vmem:[%s4 + $0xc] sm:$0xf]
    %v611 = vld [vmem:[%s4 + $0x10] sm:$0xf]
    %v612 = vld [vmem:[%s4 + $0x14] sm:$0xf]
    %v613 = vld [vmem:[%s4 + $0x18] sm:$0xf]
    %v614 = vld [vmem:[%s4 + $0x1c] sm:$0xf]
    %v615 = vld [vmem:[%s4 + $0x20] sm:$0xf]
    %v616 = vld [vmem:[%s4 + $0x24] sm:$0xf]
    %v617 = vld [vmem:[%s4 + $0x28] sm:$0xf]
    %v618 = vld [vmem:[%s4 + $0x2c] sm:$0xf]
    %v631 = vunpack.c.l.b16 %v607
    %v632 = vunpack.c.l.b16 %v608
    %v633 = vunpack.c.l.b16 %v609
    %v634 = vunpack.c.l.b16 %v610
    %v635 = vunpack.c.l.b16 %v611
    %v636 = vunpack.c.l.b16 %v612
    %v637 = vunpack.c.l.b16 %v613
    %v638 = vunpack.c.l.b16 %v614
    %v639 = vunpack.c.l.b16 %v615
    %v640 = vunpack.c.l.b16 %v616
    %v641 = vunpack.c.l.b16 %v617
    %v642 = vunpack.c.l.b16 %v618
    %v643 = vpack.c.b16 %v632, %v631
    %v644 = vpack.c.b16 %v634, %v633
    %v645 = vpack.c.b16 %v636, %v635
    %v646 = vpack.c.b16 %v638, %v637
    %v647 = vpack.c.b16 %v640, %v639
    %v648 = vpack.c.b16 %v642, %v641
    %vm655 = vcmask 785408
    %v657 = vsel %vm655, %v599, 0
    %v660 = vsel %vm655, %v600, 0
    %v663 = vsel %vm655, %v601, 0
    %v666 = vsel %vm655, %v602, 0
    %v669 = vsel %vm655, %v603, 0
    %v672 = vsel %vm655, %v604, 0
    %v675 = vsel %vm655, %v605, 0
    %v678 = vsel %vm655, %v606, 0
    %680 = vmatpush.bf16.msra.mxu0 0
    %681 = vmatpush.bf16.msra.mxu0 0
    %682 = vmatpush.bf16.msra.mxu0 %v648
    %683 = vmatpush.bf16.msra.mxu0 %v647
    %684 = vmatpush.bf16.msra.mxu0 %v646
    %685 = vmatpush.bf16.msra.mxu0 %v645
    %686 = vmatpush.bf16.msra.mxu0 %v644
    %687 = vmatpush.bf16.msra.mxu0 %v643
    %688 = vmatmul.bf16.gmra.mxu0 %v657
    %v689 = vpop.f32.mrf.mxu0
    %v690 = vadd.f32 0.0, %v689
    %v691 = vpop.f32.mrf.mxu0
    %v692 = vadd.f32 0.0, %v691
    %693 = vmatmul.bf16.gmra.mxu0 %v660
    %v694 = vpop.f32.mrf.mxu0
    %v695 = vadd.f32 0.0, %v694
    %v696 = vpop.f32.mrf.mxu0
    %v697 = vadd.f32 0.0, %v696
    %698 = vmatmul.bf16.gmra.mxu0 %v663
    %v699 = vpop.f32.mrf.mxu0
    %v700 = vadd.f32 0.0, %v699
    %v701 = vpop.f32.mrf.mxu0
    %v702 = vadd.f32 0.0, %v701
    %703 = vmatmul.bf16.gmra.mxu0 %v666
    %v704 = vpop.f32.mrf.mxu0
    %v705 = vadd.f32 0.0, %v704
    %v706 = vpop.f32.mrf.mxu0
    %v707 = vadd.f32 0.0, %v706
    %708 = vmatmul.bf16.gmra.mxu0 %v669
    %v709 = vpop.f32.mrf.mxu0
    %v710 = vadd.f32 0.0, %v709
    %v711 = vpop.f32.mrf.mxu0
    %v712 = vadd.f32 0.0, %v711
    %713 = vmatmul.bf16.gmra.mxu0 %v672
    %v714 = vpop.f32.mrf.mxu0
    %v715 = vadd.f32 0.0, %v714
    %v716 = vpop.f32.mrf.mxu0
    %v717 = vadd.f32 0.0, %v716
    %718 = vmatmul.bf16.gmra.mxu0 %v675
    %v719 = vpop.f32.mrf.mxu0
    %v720 = vadd.f32 0.0, %v719
    %v721 = vpop.f32.mrf.mxu0
    %v722 = vadd.f32 0.0, %v721
    %723 = vmatmul.bf16.gmra.mxu0 %v678
    %v724 = vpop.f32.mrf.mxu0
    %v725 = vadd.f32 0.0, %v724
    %v726 = vpop.f32.mrf.mxu0
    %v727 = vadd.f32 0.0, %v726
    %728 = vdwg.mxu0
    %v729 = vadd.f32 %v22, %v690
    %v730 = vadd.f32 %v23, %v692
    %v731 = vadd.f32 %v24, %v695
    %v732 = vadd.f32 %v25, %v697
    %v733 = vadd.f32 %v26, %v700
    %v734 = vadd.f32 %v27, %v702
    %v735 = vadd.f32 %v28, %v705
    %v736 = vadd.f32 %v29, %v707
    %v737 = vadd.f32 %v30, %v710
    %v738 = vadd.f32 %v31, %v712
    %v739 = vadd.f32 %v32, %v715
    %v740 = vadd.f32 %v33, %v717
    %v741 = vadd.f32 %v34, %v720
    %v742 = vadd.f32 %v35, %v722
    %v743 = vadd.f32 %v36, %v725
    %v744 = vadd.f32 %v37, %v727
    %v745 = vld [vmem:[%s3 + $0xb] sm:$0x1]
    %v746 = vperm.slane %v745, 0
    %v747 = vadd.f32 %v729, %v746
    %v748 = vadd.f32 %v730, %v746
    %v749 = vadd.f32 %v731, %v746
    %v750 = vadd.f32 %v732, %v746
    %v751 = vadd.f32 %v733, %v746
    %v752 = vadd.f32 %v734, %v746
    %v753 = vadd.f32 %v735, %v746
    %v754 = vadd.f32 %v736, %v746
    %v755 = vadd.f32 %v737, %v746
    %v756 = vadd.f32 %v738, %v746
    %v757 = vadd.f32 %v739, %v746
    %v758 = vadd.f32 %v740, %v746
    %v759 = vadd.f32 %v741, %v746
    %v760 = vadd.f32 %v742, %v746
    %v761 = vadd.f32 %v743, %v746
    %v762 = vadd.f32 %v744, %v746
    %763 = vst.msk [vmem:[#allocation2] sm:$0xff] %vm108, %v747
    %764 = vst.msk [vmem:[#allocation2 + $0x8] sm:$0xff] %vm108, %v748
    %765 = vst.msk [vmem:[#allocation2 + $0x10] sm:$0xff] %vm108, %v749
    %766 = vst.msk [vmem:[#allocation2 + $0x18] sm:$0xff] %vm108, %v750
    %767 = vst.msk [vmem:[#allocation2 + $0x20] sm:$0xff] %vm108, %v751
    %768 = vst.msk [vmem:[#allocation2 + $0x28] sm:$0xff] %vm108, %v752
    %769 = vst.msk [vmem:[#allocation2 + $0x30] sm:$0xff] %vm108, %v753
    %770 = vst.msk [vmem:[#allocation2 + $0x38] sm:$0xff] %vm108, %v754
    %771 = vst.msk [vmem:[#allocation2 + $0x40] sm:$0xff] %vm108, %v755
    %772 = vst.msk [vmem:[#allocation2 + $0x48] sm:$0xff] %vm108, %v756
    %773 = vst.msk [vmem:[#allocation2 + $0x50] sm:$0xff] %vm108, %v757
    %774 = vst.msk [vmem:[#allocation2 + $0x58] sm:$0xff] %vm108, %v758
    %775 = vst.msk [vmem:[#allocation2 + $0x60] sm:$0xff] %vm108, %v759
    %776 = vst.msk [vmem:[#allocation2 + $0x68] sm:$0xff] %vm108, %v760
    %777 = vst.msk [vmem:[#allocation2 + $0x70] sm:$0xff] %vm108, %v761
    %778 = vst.msk [vmem:[#allocation2 + $0x78] sm:$0xff] %vm108, %v762
    // Predicated region
    $region22: #{inverted_residual_with_shift_nhwc.1} parent=1 // pred_check
      _
    $region23: #{inverted_residual_with_shift_nhwc.1} parent=1 // pred_check_branch
      %780 = sbr.rel (0) target = $region25
    $region24: #{inverted_residual_with_shift_nhwc.1} parent=1 // pred_region
      %782 = vsyncadd [#allocation3], 0
      %s783 = sshll.u32 [#allocation2], 4
      %s784 = int_to_ptr.vmem [resolvable:$true] %s783
      %s785 = sshll.u32 %s5, 4
      %s786 = int_to_ptr.hbm [resolvable:$true] %s785
      %791 = dma.vmem_to_hbm [thread:$0]  %s784, 2048, %s786, [#allocation3], 128, 128, 8
    $region25: #{inverted_residual_with_shift_nhwc.1} parent=1 // pred_fallthru
      _
    // Predicated region
    $region26: #{inverted_residual_with_shift_nhwc.1} parent=1 // pred_check
      _
    $region27: #{inverted_residual_with_shift_nhwc.1} parent=1 // pred_check_branch
      %793 = sbr.rel (0) target = $region29
    $region28: #{inverted_residual_with_shift_nhwc.1} parent=1 // pred_region
      %795 = dma.done [#allocation3], 2048
    $region29: #{inverted_residual_with_shift_nhwc.1} parent=1 // pred_fallthru
      _
    %796 = vsyncpa [#allocation3], 1

</llo_original>
